<compile_context>
chip_gen: v7x
topology: tpu7x:2x2x1
jax: 0.10.0
libtpu: 0.0.40
codegen_flags: <defaults>
</compile_context>

<pallas_src>
import random

import numpy as np
import jax
import jax.numpy as jnp
from jax.experimental import pallas as pl
from jax.experimental.pallas import tpu as pltpu


_TARGET_BLOCK_BYTES = 1 << 20   # ~1 MiB of input per grid step (overhead amortisation)
_KRON_MAX_PIXELS = 1024         # use the single-matmul Kronecker path when H*W <= this
_MAX_SEP_BATCH = 16             # cap on images per step in the separable path


# ----------------------------------------------------------------------------
# Host-side construction of the reflection-folded banded blur matrices.
# ----------------------------------------------------------------------------
def _reflect_index(j, n):
    # nn.ReflectionPad2d semantics (edge sample not repeated).
    if j < 0:
        return -j
    if j >= n:
        return 2 * (n - 1) - j
    return j


def _blur_matrix(g1d, n, pad):
    """Banded 1D-blur matrix with reflection padding folded in: out = B @ x."""
    L = len(g1d)
    B = np.zeros((n, n), np.float64)
    for i in range(n):
        for k in range(L):
            j = _reflect_index(i + k - pad, n)
            B[i, j] += g1d[k]
    return B


# ----------------------------------------------------------------------------
# Path A: small images — one resident (H*W, H*W) Kronecker weight, one matmul.
# ----------------------------------------------------------------------------
def _blur_kron_pallas(xs, kt, compute_dtype):
    """xs: (N, H, W); kt: (H*W, H*W) = kron(B_h, B_w)^T."""
    N, H, W = xs.shape
    HW = H * W
    xr = xs.reshape(N, HW)                    # contiguous reshape, no relayout
    itemsize = xr.dtype.itemsize
    kt_c = kt.astype(compute_dtype)

    # Rows (= images) per grid step: target ~1 MiB of input, multiple of 8.
    bm = max(8, _TARGET_BLOCK_BYTES // (HW * itemsize))
    bm = min(bm, 512)
    if bm >= N:
        bm, G, Npad = N, 1, N                 # block dim == full dim: no pad needed
    else:
        bm = max(8, (bm // 8) * 8)
        G = -(-N // bm)
        Npad = G * bm
        xr = jnp.pad(xr, ((0, Npad - N), (0, 0)))

    flops = 2 * Npad * HW * HW
    bytes_accessed = 2 * Npad * HW * itemsize + kt_c.size * kt_c.dtype.itemsize
    vmem_need = (2 * kt_c.size * kt_c.dtype.itemsize          # resident weight (x2 safety)
                 + 4 * bm * HW * itemsize                      # in + out, double-buffered
                 + 2 * bm * HW * 4)                            # f32 intermediates
    vmem_limit = int(min(max(vmem_need * 5 // 4, 16 << 20), 48 << 20))

    def kernel(kt_ref, x_ref, o_ref):
        x = x_ref[...].astype(compute_dtype)                   # (bm, HW)
        y = jnp.dot(x, kt_ref[...], preferred_element_type=jnp.float32)
        o_ref[...] = y.astype(o_ref.dtype)

    out = pl.pallas_call(
        kernel,
        out_shape=jax.ShapeDtypeStruct((Npad, HW), xs.dtype),
        grid=(G,),
        in_specs=[
            pl.BlockSpec((HW, HW), lambda i: (0, 0)),          # weight resident in VMEM
            pl.BlockSpec((bm, HW), lambda i: (i, 0)),
        ],
        out_specs=pl.BlockSpec((bm, HW), lambda i: (i, 0)),
        compiler_params=pltpu.CompilerParams(
            dimension_semantics=("parallel",),
            vmem_limit_bytes=vmem_limit),
        cost_estimate=pl.CostEstimate(flops=flops, transcendentals=0,
                                      bytes_accessed=bytes_accessed),
    )(kt_c, xr)
    return out[:N].reshape(N, H, W)


# ----------------------------------------------------------------------------
# Path B: larger images — separable blur, Bg images per grid step, two MXU
# matmuls per image, resident (H,H) / (W,W) weights, no relayout.
# NOTE: for extremely large H or W (weight >> VMEM) a K-tiled matmul would be
# needed; typical image sizes are fine.
# ----------------------------------------------------------------------------
def _blur_separable_pallas(xs, b_h, b_wT, compute_dtype):
    """xs: (N, H, W); b_h: (H, H); b_wT: (W, W) (already transposed)."""
    N, H, W = xs.shape
    itemsize = xs.dtype.itemsize
    bh_c = b_h.astype(compute_dtype)
    bwt_c = b_wT.astype(compute_dtype)

    bg = max(1, _TARGET_BLOCK_BYTES // (H * W * itemsize))
    bg = min(bg, _MAX_SEP_BATCH, N)
    G = -(-N // bg)
    Npad = G * bg
    if Npad != N:
        xs = jnp.pad(xs, ((0, Npad - N), (0, 0), (0, 0)))

    flops = Npad * (2 * H * H * W + 2 * H * W * W)
    bytes_accessed = (2 * Npad * H * W * itemsize
                      + (bh_c.size + bwt_c.size) * bh_c.dtype.itemsize)
    vmem_need = (2 * (bh_c.size + bwt_c.size) * bh_c.dtype.itemsize
                 + 4 * bg * H * W * itemsize
                 + 2 * H * W * 4)
    vmem_limit = int(min(max(vmem_need * 5 // 4, 16 << 20), 48 << 20))

    def kernel(bh_ref, bwt_ref, x_ref, o_ref):
        bh = bh_ref[...]
        bwt = bwt_ref[...]
        n_img = x_ref.shape[0]                                 # static == bg

        def body(b, carry):
            xb = x_ref[b].astype(compute_dtype)                # (H, W)
            zb = jnp.dot(bh, xb, preferred_element_type=jnp.float32)       # row blur
            yb = jnp.dot(zb.astype(compute_dtype), bwt,
                         preferred_element_type=jnp.float32)               # col blur
            o_ref[b] = yb.astype(o_ref.dtype)
            return carry

        jax.lax.fori_loop(0, n_img, body, 0, unroll=True)

    out = pl.pallas_call(
        kernel,
        out_shape=jax.ShapeDtypeStruct((Npad, H, W), xs.dtype),
        grid=(G,),
        in_specs=[
            pl.BlockSpec((H, H), lambda i: (0, 0)),            # resident weights
            pl.BlockSpec((W, W), lambda i: (0, 0)),
            pl.BlockSpec((bg, H, W), lambda i: (i, 0, 0)),
        ],
        out_specs=pl.BlockSpec((bg, H, W), lambda i: (i, 0, 0)),
        compiler_params=pltpu.CompilerParams(
            dimension_semantics=("parallel",),
            vmem_limit_bytes=vmem_limit),
        cost_estimate=pl.CostEstimate(flops=flops, transcendentals=0,
                                      bytes_accessed=bytes_accessed),
    )(bh_c, bwt_c, xs)
    return out[:N]


# ----------------------------------------------------------------------------
# Module
# ----------------------------------------------------------------------------
class RandomBlur:
    """JAX/Pallas port of TorchNet.modules.RandomBlur (forward pass)."""

    def __init__(self, input_channel=1, kernel_size=15, sigma_min=0.0,
                 sigma_max=1.4, compute_dtype=jnp.float32):
        self.min = sigma_min
        self.max = sigma_max
        self.l = kernel_size
        self.input_channel = input_channel
        self.pad = kernel_size // 2
        # Default f32 keeps 1e-4 parity with the conv reference; jnp.bfloat16
        # trades ~1e-3 relative error for 3-6x faster MXU matmuls.
        self.compute_dtype = compute_dtype

    def _g1d(self, sigma):
        # Clamp guards sigma == 0 (the original would produce 0/0 NaN taps);
        # for any sigma > eps this matches the PyTorch Gaussian exactly.
        sigma = max(float(sigma), 1e-6)
        ax = np.arange(-self.l // 2 + 1.0, self.l // 2 + 1.0)
        g = np.exp(-(ax ** 2) / (2.0 * sigma ** 2))
        return g / g.sum()

    def _g_kernel(self, sigma):
        # Full 2D kernel (reference parity with the PyTorch module).
        sigma = max(float(sigma), 1e-6)
        ax = np.arange(-self.l // 2 + 1.0, self.l // 2 + 1.0)
        xx, yy = np.meshgrid(ax, ax)
        k = np.exp(-(xx ** 2 + yy ** 2) / (2.0 * sigma ** 2))
        return (k / np.sum(k)).astype(np.float32)

    def __call__(self, x):
        # sigma drawn from Python's `random` (seed it outside for determinism),
        # mirroring random.uniform(self.min, self.max) in the PyTorch forward.
        sigma_random = random.uniform(self.min, self.max)
        g = self._g1d(sigma_random)

        x = jnp.asarray(x)
        if not jnp.issubdtype(x.dtype, jnp.floating):
            x = x.astype(jnp.float32)          # conv semantics are floating-point
        N, C, H, W = x.shape
        assert C == self.input_channel
        assert self.pad <= min(H, W) - 1, "reflection pad must be < spatial dim"

        # Reflection padding + separable Gaussian folded into banded matrices.
        b_h = _blur_matrix(g, H, self.pad)                     # (H, H)
        b_w = _blur_matrix(g, W, self.pad)                     # (W, W)

        # The original .view((1, C, l, l)) only type-checks for C == 1; like the
        # PyTorch module, the output is single-channel (channel-summed for C>1).
        xs = x[:, 0] if C == 1 else jnp.sum(x, axis=1)

        if H * W <= _KRON_MAX_PIXELS:
            # Small-image path: one resident kron(B_h, B_w)^T weight, one matmul.
            kt = jnp.asarray(np.kron(b_h, b_w).T, dtype=jnp.float32)
            y = _blur_kron_pallas(xs, kt, self.compute_dtype)
        else:
            y = _blur_separable_pallas(
                xs,
                jnp.asarray(b_h, dtype=jnp.float32),
                jnp.asarray(b_w.T, dtype=jnp.float32),
                self.compute_dtype)
        return y[:, None, :, :]                                # (N, 1, H, W)


# ----------------------------------------------------------------------------
# Self-test
# ----------------------------------------------------------------------------
if __name__ == "__main__":
    def reference(blur, x, sigma):
        # Original semantics: reflection pad + full 2D Gaussian cross-correlation.
        k = jnp.asarray(blur._g_kernel(sigma).reshape(1, 1, blur.l, blur.l))
        p = blur.pad
        xpad = jnp.pad(x, ((0, 0), (0, 0), (p, p), (p, p)), mode="reflect")
        return jax.lax.conv_general_dilated(
            xpad, k, window_strides=(1, 1), padding="VALID",
            dimension_numbers=("NCHW", "OIHW", "NCHW"))

    key = jax.random.PRNGKey(0)
    k1, k2 = jax.random.split(key)
    blur = RandomBlur(input_channel=1, kernel_size=15)

    # --- small image (16x16): Kronecker single-matmul path -------------------
    x_small = jax.random.normal(k1, (2, 1, 16, 16), dtype=jnp.float32)
    random.seed(0)
    y_small = jax.block_until_ready(blur(x_small))
    random.seed(0)
    sigma0 = random.uniform(blur.min, blur.max)
    y_small_ref = reference(blur, x_small, sigma0)
    assert y_small.shape == (2, 1, 16, 16)
    np.testing.assert_allclose(np.asarray(y_small), np.asarray(y_small_ref),
                               rtol=1e-4, atol=1e-4)

    # --- larger image (40x40): separable two-matmul path ---------------------
    x_big = jax.random.normal(k2, (3, 1, 40, 40), dtype=jnp.float32)
    random.seed(1)
    y_big = jax.block_until_ready(blur(x_big))
    random.seed(1)
    sigma1 = random.uniform(blur.min, blur.max)
    y_big_ref = reference(blur, x_big, sigma1)
    assert y_big.shape == (3, 1, 40, 40)
    np.testing.assert_allclose(np.asarray(y_big), np.asarray(y_big_ref),
                               rtol=1e-4, atol=1e-4)

    print("KERNEL_OK")
</pallas_src>

<mosaic_0001>
module attributes {stable_mosaic.version = 11 : i64} {
  func.func @kernel(%arg0: i32, %arg1: memref<256x256xf32, #tpu.memory_space<vmem>>, %arg2: memref<2x256xf32, #tpu.memory_space<vmem>>, %arg3: memref<2x256xf32, #tpu.memory_space<vmem>>) attributes {dimension_semantics = [#tpu.dimension_semantics<parallel>], iteration_bounds = array<i64: 1>, scalar_prefetch = 0 : i64, scratch_operands = 0 : i64, tpu.core_type = #tpu.core_type<tc>, window_params = [{pipeline_mode = #tpu.pipeline_mode<synchronous>, transform_indices = @transform_0, window_bounds = array<i64: 256, 256>}, {transform_indices = @transform_1, window_bounds = array<i64: 2, 256>}, {transform_indices = @transform_2, window_bounds = array<i64: 2, 256>}]} {
    %c0 = arith.constant 0 : index
    %c0_0 = arith.constant 0 : index
    %0 = vector.load %arg2[%c0, %c0_0] : memref<2x256xf32, #tpu.memory_space<vmem>>, vector<2x256xf32>
    %c0_1 = arith.constant 0 : index
    %c0_2 = arith.constant 0 : index
    %1 = vector.load %arg1[%c0_1, %c0_2] : memref<256x256xf32, #tpu.memory_space<vmem>>, vector<256x256xf32>
    %cst = arith.constant dense<0.000000e+00> : vector<2x256xf32>
    %2 = tpu.matmul %0, %1, %cst {dimension_numbers = #tpu.dot_dimension_numbers<[1], [0], [0], [1], [0, 0, 1, 1], [], []>} : vector<2x256xf32>, vector<256x256xf32>, vector<2x256xf32> -> vector<2x256xf32>
    %c0_3 = arith.constant 0 : index
    %c0_4 = arith.constant 0 : index
    %3 = vector.load %arg3[%c0_3, %c0_4] : memref<2x256xf32, #tpu.memory_space<vmem>>, vector<2x256xf32>
    tpu.vector_store %arg3[%c0_3, %c0_4], %2 {strides = array<i32>} : memref<2x256xf32, #tpu.memory_space<vmem>>, vector<2x256xf32>,
    return
  }
  func.func @transform_0(%arg0: i32) -> (i32, i32) {
    %c0_i32 = arith.constant 0 : i32
    %c0_i32_0 = arith.constant 0 : i32
    %c0_i32_1 = arith.constant 0 : i32
    return %c0_i32, %c0_i32_0 : i32, i32
  }
  func.func @transform_1(%arg0: i32) -> (i32, i32) {
    %c0_i32 = arith.constant 0 : i32
    %c0_i32_0 = arith.constant 0 : i32
    return %arg0, %c0_i32 : i32, i32
  }
  func.func @transform_2(%arg0: i32) -> (i32, i32) {
    %c0_i32 = arith.constant 0 : i32
    %c0_i32_0 = arith.constant 0 : i32
    return %arg0, %c0_i32 : i32, i32
  }
}

</mosaic_0001>

<llo_original>
// kernel: tpu_custom_call.1
$region0: #{tpu_custom_call.1}
  #allocation0 [shape = 'u32[]', space=smem, size = 0x4, offset = 0x4, fixed_abs, tag = 'smem constant byte address 0x4 - core index']
  #allocation1 [shape = 'u32[144,128]{1,0:T(1,128)}', space=vmem, size = 0x12000, scoped, tag = 'internal scratch']
  %s0 = inlined_call_operand.hbm [shape: f32[256,256], index: 0, kind: input, shape index: {}]
  %s1 = inlined_call_operand.hbm [shape: f32[2,256], index: 1, kind: input, shape index: {}]
  %s2 = inlined_call_operand.hbm [shape: f32[2,256], index: 2, kind: output, shape index: {}]
  %s3 = sld [smem:[#allocation0]]
  $region26: #{tpu_custom_call.1} parent=0
    _
  %s5 = ssub.s32 1, %s3
  %s6 = scalar_select 0, %s5, %s3
  $region1: #{tpu_custom_call.1} parent=0
    #allocation2 [shape = 'u8[262144]{0}', space=vmem, size = 0x40000, scoped, tag = 'input window, operand 0, single buffered']
    #allocation3 [shape = 's32[1]{0}', space=sflag, size = 0x4, scoped, tag = 'scoped memory for tpu_custom_call.1']
    #allocation4 [shape = 's32[1]{0}', space=sflag, size = 0x4, scoped, tag = 'scoped memory for tpu_custom_call.1']
    #allocation5 [shape = 'u8[2048]{0}', space=vmem, size = 0x800, scoped, tag = 'input window, operand 1, single buffered']
    #allocation6 [shape = 's32[1]{0}', space=sflag, size = 0x4, scoped, tag = 'scoped memory for tpu_custom_call.1']
    #allocation7 [shape = 'u8[2048]{0}', space=vmem, size = 0x800, scoped, tag = 'output window, operand 0, single buffered']
    %7 = vsyncpa [#allocation3], 0
    %8 = vsyncpa [#allocation6], 0
    %9 = vsyncpa [#allocation4], 0
    // Predicated region
    $region2: #{tpu_custom_call.1} parent=1 // pred_check
      _
    $region3: #{tpu_custom_call.1} parent=1 // pred_check_branch
      %11 = sbr.rel (0) target = $region5
    $region4: #{tpu_custom_call.1} parent=1 // pred_region
      %s13 = ssub.s32 8192, 8192
      %14 = vsyncadd [#allocation3], %s13
      %s15 = sshll.u32 [#allocation2], 4
      %s16 = int_to_ptr.vmem [resolvable:$true] %s15
      %21 = dma.hbm_to_vmem [thread:$0]  %s0, 8192, %s16, [#allocation3], 256, 256, 16
    $region5: #{tpu_custom_call.1} parent=1 // pred_fallthru
      _
    // Predicated region
    $region6: #{tpu_custom_call.1} parent=1 // pred_check
      _
    $region7: #{tpu_custom_call.1} parent=1 // pred_check_branch
      %23 = sbr.rel (0) target = $region9
    $region8: #{tpu_custom_call.1} parent=1 // pred_region
      %s25 = ssub.s32 64, 64
      %26 = vsyncadd [#allocation6], %s25
      %s28 = sshll.u32 [#allocation5], 4
      %s29 = int_to_ptr.vmem [resolvable:$true] %s28
      %31 = dma.hbm_to_vmem [thread:$0]  %s1, 64, %s29, [#allocation6]
    $region9: #{tpu_custom_call.1} parent=1 // pred_fallthru
      _
    // Predicated region
    $region10: #{tpu_custom_call.1} parent=1 // pred_check
      _
    $region11: #{tpu_custom_call.1} parent=1 // pred_check_branch
      %33 = sbr.rel (0) target = $region13
    $region12: #{tpu_custom_call.1} parent=1 // pred_region
      %34 = dma.done [#allocation3], 8192
    $region13: #{tpu_custom_call.1} parent=1 // pred_fallthru
      _
    // Predicated region
    $region14: #{tpu_custom_call.1} parent=1 // pred_check
      _
    $region15: #{tpu_custom_call.1} parent=1 // pred_check_branch
      %36 = sbr.rel (0) target = $region17
    $region16: #{tpu_custom_call.1} parent=1 // pred_region
      %37 = dma.done [#allocation6], 64
    $region17: #{tpu_custom_call.1} parent=1 // pred_fallthru
      _
    %v38 = vld [vmem:[#allocation5] sm:$0xf]
    %v39 = vld [vmem:[#allocation2] sm:$0xff]
    %v40 = vld [vmem:[#allocation2 + $0x8] sm:$0xff]
    %v41 = vld [vmem:[#allocation2 + $0x10] sm:$0xff]
    %v42 = vld [vmem:[#allocation2 + $0x18] sm:$0xff]
    %v43 = vld [vmem:[#allocation2 + $0x20] sm:$0xff]
    %v44 = vld [vmem:[#allocation2 + $0x28] sm:$0xff]
    %v45 = vld [vmem:[#allocation2 + $0x30] sm:$0xff]
    %v46 = vld [vmem:[#allocation2 + $0x38] sm:$0xff]
    %v47 = vld [vmem:[#allocation2 + $0x40] sm:$0xff]
    %v48 = vld [vmem:[#allocation2 + $0x48] sm:$0xff]
    %v49 = vld [vmem:[#allocation2 + $0x50] sm:$0xff]
    %v50 = vld [vmem:[#allocation2 + $0x58] sm:$0xff]
    %v51 = vld [vmem:[#allocation2 + $0x60] sm:$0xff]
    %v52 = vld [vmem:[#allocation2 + $0x68] sm:$0xff]
    %v53 = vld [vmem:[#allocation2 + $0x70] sm:$0xff]
    %v54 = vld [vmem:[#allocation2 + $0x78] sm:$0xff]
    %v55 = vld [vmem:[#allocation2 + $0x80] sm:$0xff]
    %v56 = vld [vmem:[#allocation2 + $0x88] sm:$0xff]
    %v57 = vld [vmem:[#allocation2 + $0x90] sm:$0xff]
    %v58 = vld [vmem:[#allocation2 + $0x98] sm:$0xff]
    %v59 = vld [vmem:[#allocation2 + $0xa0] sm:$0xff]
    %v60 = vld [vmem:[#allocation2 + $0xa8] sm:$0xff]
    %v61 = vld [vmem:[#allocation2 + $0xb0] sm:$0xff]
    %v62 = vld [vmem:[#allocation2 + $0xb8] sm:$0xff]
    %v63 = vld [vmem:[#allocation2 + $0xc0] sm:$0xff]
    %v64 = vld [vmem:[#allocation2 + $0xc8] sm:$0xff]
    %v65 = vld [vmem:[#allocation2 + $0xd0] sm:$0xff]
    %v66 = vld [vmem:[#allocation2 + $0xd8] sm:$0xff]
    %v67 = vld [vmem:[#allocation2 + $0xe0] sm:$0xff]
    %v68 = vld [vmem:[#allocation2 + $0xe8] sm:$0xff]
    %v69 = vld [vmem:[#allocation2 + $0xf0] sm:$0xff]
    %v70 = vld [vmem:[#allocation2 + $0xf8] sm:$0xff]
    %v71 = vld [vmem:[#allocation2 + $0x100] sm:$0xff]
    %v72 = vld [vmem:[#allocation2 + $0x108] sm:$0xff]
    %v73 = vld [vmem:[#allocation2 + $0x110] sm:$0xff]
    %v74 = vld [vmem:[#allocation2 + $0x118] sm:$0xff]
    %v75 = vld [vmem:[#allocation2 + $0x120] sm:$0xff]
    %v76 = vld [vmem:[#allocation2 + $0x128] sm:$0xff]
    %v77 = vld [vmem:[#allocation2 + $0x130] sm:$0xff]
    %v78 = vld [vmem:[#allocation2 + $0x138] sm:$0xff]
    %v79 = vld [vmem:[#allocation2 + $0x140] sm:$0xff]
    %v80 = vld [vmem:[#allocation2 + $0x148] sm:$0xff]
    %v81 = vld [vmem:[#allocation2 + $0x150] sm:$0xff]
    %v82 = vld [vmem:[#allocation2 + $0x158] sm:$0xff]
    %v83 = vld [vmem:[#allocation2 + $0x160] sm:$0xff]
    %v84 = vld [vmem:[#allocation2 + $0x168] sm:$0xff]
    %v85 = vld [vmem:[#allocation2 + $0x170] sm:$0xff]
    %v86 = vld [vmem:[#allocation2 + $0x178] sm:$0xff]
    %v87 = vld [vmem:[#allocation2 + $0x180] sm:$0xff]
    %v88 = vld [vmem:[#allocation2 + $0x188] sm:$0xff]
    %v89 = vld [vmem:[#allocation2 + $0x190] sm:$0xff]
    %v90 = vld [vmem:[#allocation2 + $0x198] sm:$0xff]
    %v91 = vld [vmem:[#allocation2 + $0x1a0] sm:$0xff]
    %v92 = vld [vmem:[#allocation2 + $0x1a8] sm:$0xff]
    %v93 = vld [vmem:[#allocation2 + $0x1b0] sm:$0xff]
    %v94 = vld [vmem:[#allocation2 + $0x1b8] sm:$0xff]
    %v95 = vld [vmem:[#allocation2 + $0x1c0] sm:$0xff]
    %v96 = vld [vmem:[#allocation2 + $0x1c8] sm:$0xff]
    %v97 = vld [vmem:[#allocation2 + $0x1d0] sm:$0xff]
    %v98 = vld [vmem:[#allocation2 + $0x1d8] sm:$0xff]
    %v99 = vld [vmem:[#allocation2 + $0x1e0] sm:$0xff]
    %v100 = vld [vmem:[#allocation2 + $0x1e8] sm:$0xff]
    %v101 = vld [vmem:[#allocation2 + $0x1f0] sm:$0xff]
    %v102 = vld [vmem:[#allocation2 + $0x1f8] sm:$0xff]
    %v105 = vunpack.c.l.s4 1983009808
    %v106 = vunpack.c.0.s8 %v105
    %v107 = vlaneseq
    %v108 = vshrl.u32 %v107, 7
    %v109 = vsub.s32 %v106, %v108
    %v110 = vrot.slane %v38, %v109
    %v111 = vcombine.high %v110, %v110
    %114 = vmatprep.subr.mxu0 %v40
    %115 = vmatpush1.msra.mxu0 %v39
    %116 = vmatprep.subr.mxu0 %v42
    %117 = vmatpush1.msra.mxu0 %v41
    %118 = vmatprep.subr.mxu0 %v44
    %119 = vmatpush1.msra.mxu0 %v43
    %120 = vmatprep.subr.mxu0 %v46
    %121 = vmatpush1.msra.mxu0 %v45
    %122 = vmatprep.subr.mxu0 %v48
    %123 = vmatpush1.msra.mxu0 %v47
    %124 = vmatprep.subr.mxu0 %v50
    %125 = vmatpush1.msra.mxu0 %v49
    %126 = vmatprep.subr.mxu0 %v52
    %127 = vmatpush1.msra.mxu0 %v51
    %128 = vmatprep.subr.mxu0 %v54
    %129 = vmatpush1.msra.mxu0 %v53
    %130 = vmatprep.subr.mxu0 %v56
    %131 = vmatpush1.msra.mxu0 %v55
    %132 = vmatprep.subr.mxu0 %v58
    %133 = vmatpush1.msra.mxu0 %v57
    %134 = vmatprep.subr.mxu0 %v60
    %135 = vmatpush1.msra.mxu0 %v59
    %136 = vmatprep.subr.mxu0 %v62
    %137 = vmatpush1.msra.mxu0 %v61
    %138 = vmatprep.subr.mxu0 %v64
    %139 = vmatpush1.msra.mxu0 %v63
    %140 = vmatprep.subr.mxu0 %v66
    %141 = vmatpush1.msra.mxu0 %v65
    %142 = vmatprep.subr.mxu0 %v68
    %143 = vmatpush1.msra.mxu0 %v67
    %144 = vmatprep.subr.mxu0 %v70
    %145 = vmatpush1.msra.mxu0 %v69
    %146 = vmatprep.subr.mxu0 %v72
    %147 = vmatpush1.msra.mxu0 %v71
    %148 = vmatprep.subr.mxu0 %v74
    %149 = vmatpush1.msra.mxu0 %v73
    %150 = vmatprep.subr.mxu0 %v76
    %151 = vmatpush1.msra.mxu0 %v75
    %152 = vmatprep.subr.mxu0 %v78
    %153 = vmatpush1.msra.mxu0 %v77
    %154 = vmatprep.subr.mxu0 %v80
    %155 = vmatpush1.msra.mxu0 %v79
    %156 = vmatprep.subr.mxu0 %v82
    %157 = vmatpush1.msra.mxu0 %v81
    %158 = vmatprep.subr.mxu0 %v84
    %159 = vmatpush1.msra.mxu0 %v83
    %160 = vmatprep.subr.mxu0 %v86
    %161 = vmatpush1.msra.mxu0 %v85
    %162 = vmatprep.subr.mxu0 %v88
    %163 = vmatpush1.msra.mxu0 %v87
    %164 = vmatprep.subr.mxu0 %v90
    %165 = vmatpush1.msra.mxu0 %v89
    %166 = vmatprep.subr.mxu0 %v92
    %167 = vmatpush1.msra.mxu0 %v91
    %168 = vmatprep.subr.mxu0 %v94
    %169 = vmatpush1.msra.mxu0 %v93
    %170 = vmatprep.subr.mxu0 %v96
    %171 = vmatpush1.msra.mxu0 %v95
    %172 = vmatprep.subr.mxu0 %v98
    %173 = vmatpush1.msra.mxu0 %v97
    %174 = vmatprep.subr.mxu0 %v100
    %175 = vmatpush1.msra.mxu0 %v99
    %176 = vmatprep.subr.mxu0 %v102
    %177 = vmatpush1.msra.mxu0 %v101
    %178 = vmatprep.mubr.f32.mxu0 %v111
    %179 = vmatmul.mubr.f32.gmra.mrb[0].mxu0 %v110
    %v180 = vpop.f32.mrb[0].mxu0
    %v181 = vadd.f32 0.0, %v180
    %v182 = vpop.f32.mrb[0].mxu0
    %v183 = vadd.f32 0.0, %v182
    %184 = vdwg.mxu0
    %v187 = vcombine.low %v181, %v183
    %v189 = vunpack.c.l.s4 1983009808
    %v190 = vunpack.c.0.s8 %v189
    %v191 = vlaneseq
    %v192 = vshrl.u32 %v191, 7
    %v193 = vsub.s32 %v190, %v192
    %v194 = vrot.slane %v187, %v193
    %196 = vst [vmem:[#allocation7] sm:$0xf] %v194
    // Predicated region
    $region18: #{tpu_custom_call.1} parent=1 // pred_check
      _
    $region19: #{tpu_custom_call.1} parent=1 // pred_check_branch
      %198 = sbr.rel (0) target = $region21
    $region20: #{tpu_custom_call.1} parent=1 // pred_region
      %s200 = ssub.s32 64, 64
      %201 = vsyncadd [#allocation4], %s200
      %s203 = sshll.u32 [#allocation7], 4
      %s204 = int_to_ptr.vmem [resolvable:$true] %s203
      %206 = dma.vmem_to_hbm [thread:$0]  %s204, 64, %s2, [#allocation4]
    $region21: #{tpu_custom_call.1} parent=1 // pred_fallthru
      _
    // Predicated region
    $region22: #{tpu_custom_call.1} parent=1 // pred_check
      _
    $region23: #{tpu_custom_call.1} parent=1 // pred_check_branch
      %208 = sbr.rel (0) target = $region25
    $region24: #{tpu_custom_call.1} parent=1 // pred_region
      %209 = dma.done [#allocation4], 64
    $region25: #{tpu_custom_call.1} parent=1 // pred_fallthru
      _
    %210 = vsyncpa [#allocation3], 1
    %211 = vsyncpa [#allocation6], 1
    %212 = vsyncpa [#allocation4], 1

</llo_original>
